<compile_context>
chip_gen: v7x
topology: tpu7x:2x2x1
jax: 0.10.0
libtpu: 0.0.40
codegen_flags: <defaults>
</compile_context>

<pallas_src>
import jax
import jax.numpy as jnp
from jax.experimental import pallas as pl
from jax.experimental.pallas import tpu as pltpu

LANE = 128


def _cdiv(a, b):
    return (a + b - 1) // b


def _round_up(x, m):
    return _cdiv(x, m) * m


def _vmem_budget_bytes():
    """Generation-aware per-TensorCore VMEM budget (leave ~25% headroom)."""
    try:
        cap = int(pltpu.get_tpu_info().vmem_capacity_bytes)
    except Exception:
        cap = 64 * 1024 * 1024  # conservative default (v7x per-TC capacity)
    return (cap * 3) // 4


def invrot_kernel(w_ref, x_ref, o_ref):
    # w_ref: (dim, dim) resident weight tile (same block every grid step)
    # x_ref: (dim, T)   one activation tile (lane axis = width / folded batch)
    # o_ref: (dim, T)   lane-dense store
    o_ref[...] = jnp.dot(
        w_ref[...], x_ref[...], preferred_element_type=jnp.float32
    ).astype(o_ref.dtype)


def inv_rotation_forward(weight, x):
    """weight: (dim, dim) float32 orthogonal; x: (B, dim, W).

    Returns (out, logdet) matching the PyTorch forward.
    """
    B, H, W = x.shape
    dim = weight.shape[0]
    assert H == dim, "height of input must equal dim (as in the PyTorch module)"

    itemsize = jnp.dtype(x.dtype).itemsize
    w_itemsize = jnp.dtype(weight.dtype).itemsize

    budget = _vmem_budget_bytes()
    # TODO(synk): no K-axis tiling of the weight — for very large dim the
    # resident (dim, dim) block (double-buffered) would exceed VMEM; fine for
    # the small dims this flow module uses.
    weight_bytes = 2 * dim * dim * w_itemsize
    tile_budget = max(budget - weight_bytes, 4 * dim * LANE * itemsize)
    # in-tile + out-tile, double-buffered: 4 * dim * T * itemsize bytes.
    t_max = tile_budget // (4 * dim * itemsize)

    cost = pl.CostEstimate(
        flops=2 * dim * dim * B * W,
        transcendentals=0,
        bytes_accessed=itemsize * 2 * B * dim * W + w_itemsize * dim * dim,
    )

    # Fold-to-(dim, B*W) only pays off for tiny ragged widths with many
    # batches; otherwise stay zero-copy in the (B, dim, W) layout.
    use_fold = (W % LANE != 0) and (W < LANE) and (B * W >= 4 * LANE)

    if not use_fold:
        # ---------- main path: batch folded via the grid, no data movement ----------
        if W <= t_max:
            tw = W  # full-extent lane block (valid for any W)
        else:
            tw = max(LANE, (t_max // LANE) * LANE)
        grid_w = _cdiv(W, tw)
        if B * grid_w < 2 and W > 2 * LANE:
            # Keep >= 2 parallel grid steps so both v7x TensorCores get work.
            tw = _round_up(_cdiv(W, 2), LANE)
            grid_w = _cdiv(W, tw)

        out = pl.pallas_call(
            invrot_kernel,
            out_shape=jax.ShapeDtypeStruct((B, dim, W), x.dtype),
            grid_spec=pltpu.PrefetchScalarGridSpec(
                num_scalar_prefetch=0,
                grid=(B, grid_w),
                in_specs=[
                    # weight: same full tile every step (stays resident in VMEM)
                    pl.BlockSpec((dim, dim), lambda b, j: (0, 0)),
                    # activation: one batch slab, one lane-dense W tile
                    pl.BlockSpec((pl.Squeezed(), dim, tw), lambda b, j: (b, 0, j)),
                ],
                out_specs=pl.BlockSpec(
                    (pl.Squeezed(), dim, tw), lambda b, j: (b, 0, j)
                ),
            ),
            compiler_params=pltpu.CompilerParams(
                dimension_semantics=("parallel", "parallel"),
                vmem_limit_bytes=int(budget),
            ),
            cost_estimate=cost,
        )(weight, x)
    else:
        # ---------- fallback: small ragged W, many batches -> lane-dense fold ----------
        n = B * W
        x2d = jnp.transpose(x, (1, 0, 2)).reshape(dim, n)
        if n <= t_max:
            tn = n  # full-extent block (valid for any n)
        else:
            tn = max(LANE, (t_max // LANE) * LANE)
        grid_n = _cdiv(n, tn)

        out2d = pl.pallas_call(
            invrot_kernel,
            out_shape=jax.ShapeDtypeStruct((dim, n), x.dtype),
            grid_spec=pltpu.PrefetchScalarGridSpec(
                num_scalar_prefetch=0,
                grid=(grid_n,),
                in_specs=[
                    pl.BlockSpec((dim, dim), lambda j: (0, 0)),
                    pl.BlockSpec((dim, tn), lambda j: (0, j)),
                ],
                out_specs=pl.BlockSpec((dim, tn), lambda j: (0, j)),
            ),
            compiler_params=pltpu.CompilerParams(
                dimension_semantics=("parallel",),
                vmem_limit_bytes=int(budget),
            ),
            cost_estimate=cost,
        )(weight, x2d)
        out = out2d.reshape(dim, B, W).transpose(1, 0, 2)

    # logdet is a tiny parameter-only computation; kept in plain JAX.
    # TODO(synk): PyTorch computes slogdet in float64; TPU has no native f64,
    # so float32 is used here (may drift for large / ill-conditioned dim).
    logdet = jnp.float32(W) * jnp.linalg.slogdet(weight)[1].astype(jnp.float32)
    return out, logdet


if __name__ == "__main__":
    key = jax.random.PRNGKey(0)
    k_w, k_x = jax.random.split(key)

    B, dim, W = 2, 16, 16

    # Deterministic parameter init mirroring the PyTorch __init__:
    #   weight = qr(randn(dim, dim)).Q   (orthogonal init)
    raw = jax.random.normal(k_w, (dim, dim), dtype=jnp.float32)
    weight, _ = jnp.linalg.qr(raw)
    weight = weight.astype(jnp.float32)

    x = jax.random.normal(k_x, (B, dim, W), dtype=jnp.float32)

    out, logdet = inv_rotation_forward(weight, x)
    out = jax.block_until_ready(out)
    logdet = jax.block_until_ready(logdet)

    # Sanity check against plain-JAX reference.
    ref_out = jnp.einsum("ij,bjw->biw", weight, x)
    ref_logdet = jnp.float32(W) * jnp.linalg.slogdet(weight)[1].astype(jnp.float32)
    assert out.shape == (B, dim, W)
    assert jnp.allclose(out, ref_out, atol=1e-4, rtol=1e-4)
    assert jnp.allclose(logdet, ref_logdet, atol=1e-4, rtol=1e-4)

    print("KERNEL_OK")
</pallas_src>

<mosaic_0001>
module attributes {stable_mosaic.version = 11 : i64} {
  func.func @invrot_kernel(%arg0: i32, %arg1: i32, %arg2: memref<16x16xf32, #tpu.memory_space<vmem>>, %arg3: memref<1x16x16xf32, #tpu.memory_space<vmem>>, %arg4: memref<1x16x16xf32, #tpu.memory_space<vmem>>) attributes {dimension_semantics = [#tpu.dimension_semantics<parallel>, #tpu.dimension_semantics<parallel>], iteration_bounds = array<i64: 2, 1>, scalar_prefetch = 0 : i64, scratch_operands = 0 : i64, tpu.core_type = #tpu.core_type<tc>, window_params = [{pipeline_mode = #tpu.pipeline_mode<synchronous>, transform_indices = @transform_0, window_bounds = array<i64: 16, 16>}, {transform_indices = @transform_1, window_bounds = array<i64: 1, 16, 16>}, {transform_indices = @transform_2, window_bounds = array<i64: 1, 16, 16>}]} {
    %c0 = arith.constant 0 : index
    %c0_0 = arith.constant 0 : index
    %0 = vector.load %arg2[%c0, %c0_0] : memref<16x16xf32, #tpu.memory_space<vmem>>, vector<16x16xf32>
    %c0_1 = arith.constant 0 : index
    %c0_2 = arith.constant 0 : index
    %c0_3 = arith.constant 0 : index
    %1 = vector.load %arg3[%c0_1, %c0_2, %c0_3] : memref<1x16x16xf32, #tpu.memory_space<vmem>>, vector<1x16x16xf32>
    %2 = vector.shape_cast %1 : vector<1x16x16xf32> to vector<16x16xf32>
    %cst = arith.constant dense<0.000000e+00> : vector<16x16xf32>
    %3 = tpu.matmul %0, %2, %cst {dimension_numbers = #tpu.dot_dimension_numbers<[1], [0], [0], [1], [0, 0, 1, 1], [], []>} : vector<16x16xf32>, vector<16x16xf32>, vector<16x16xf32> -> vector<16x16xf32>
    %c0_4 = arith.constant 0 : index
    %c0_5 = arith.constant 0 : index
    %c0_6 = arith.constant 0 : index
    %4 = vector.load %arg4[%c0_4, %c0_5, %c0_6] : memref<1x16x16xf32, #tpu.memory_space<vmem>>, vector<1x16x16xf32>
    %5 = vector.shape_cast %4 : vector<1x16x16xf32> to vector<16x16xf32>
    %6 = vector.shape_cast %3 : vector<16x16xf32> to vector<1x16x16xf32>
    tpu.vector_store %arg4[%c0_4, %c0_5, %c0_6], %6 {strides = array<i32>} : memref<1x16x16xf32, #tpu.memory_space<vmem>>, vector<1x16x16xf32>,
    return
  }
  func.func @transform_0(%arg0: i32, %arg1: i32) -> (i32, i32) {
    %c0_i32 = arith.constant 0 : i32
    %c0_i32_0 = arith.constant 0 : i32
    %c0_i32_1 = arith.constant 0 : i32
    return %c0_i32, %c0_i32_0 : i32, i32
  }
  func.func @transform_1(%arg0: i32, %arg1: i32) -> (i32, i32, i32) {
    %c0_i32 = arith.constant 0 : i32
    %c0_i32_0 = arith.constant 0 : i32
    return %arg0, %c0_i32, %arg1 : i32, i32, i32
  }
  func.func @transform_2(%arg0: i32, %arg1: i32) -> (i32, i32, i32) {
    %c0_i32 = arith.constant 0 : i32
    %c0_i32_0 = arith.constant 0 : i32
    return %arg0, %c0_i32, %arg1 : i32, i32, i32
  }
}

</mosaic_0001>

<llo_original>
// kernel: tpu_custom_call.1
$region0: #{tpu_custom_call.1}
  #allocation0 [shape = 'u32[]', space=smem, size = 0x4, offset = 0x4, fixed_abs, tag = 'smem constant byte address 0x4 - core index']
  #allocation1 [shape = 'u32[144,128]{1,0:T(1,128)}', space=vmem, size = 0x12000, scoped, tag = 'internal scratch']
  %s0 = inlined_call_operand.hbm [shape: f32[16,16], index: 0, kind: input, shape index: {}]
  %s1 = inlined_call_operand.hbm [shape: f32[2,16,16], index: 1, kind: input, shape index: {}]
  %s2 = inlined_call_operand.hbm [shape: f32[2,16,16], index: 2, kind: output, shape index: {}]
  %s3 = sld [smem:[#allocation0]]
  $region49: #{tpu_custom_call.1} parent=0
    _
  %s5 = ssub.s32 1, %s3
  %s6 = scalar_select 0, %s5, %s3
  $region1: #{tpu_custom_call.1} parent=0
    #allocation2 [shape = 'u8[8192]{0}', space=vmem, size = 0x2000, scoped, tag = 'input window, operand 0, single buffered']
    #allocation3 [shape = 's32[2]{0}', space=sflag, size = 0x8, scoped, tag = 'scoped memory for tpu_custom_call.1']
    #allocation4 [shape = 's32[2]{0}', space=sflag, size = 0x8, scoped, tag = 'scoped memory for tpu_custom_call.1']
    #allocation5 [shape = 'u8[16384]{0}', space=vmem, size = 0x4000, scoped, tag = 'input window, operand 1']
    #allocation6 [shape = 's32[2]{0}', space=sflag, size = 0x8, scoped, tag = 'scoped memory for tpu_custom_call.1']
    #allocation7 [shape = 'u8[16384]{0}', space=vmem, size = 0x4000, scoped, tag = 'output window, operand 0']
    %7 = vsyncpa [#allocation3], 0
    %8 = vsyncpa [#allocation6], 0
    %s9 = scalar_lea.sflag [#allocation6], 1
    %10 = vsyncpa %s9, 0
    %11 = vsyncpa [#allocation4], 0
    %s12 = scalar_lea.sflag [#allocation4], 1
    %13 = vsyncpa %s12, 0
    loop: start=0, step=1, limit=4
    $region2: #{tpu_custom_call.1} parent=1 // loop_pre_header
      _
    $region3: #{tpu_custom_call.1} parent=1 // loop_header
      %s15 = sphi 0, %s19
      %p16 = scmp.ge.s32.totalorder %s15, 4
      %s22 = sphi 0, %s34
      %s23 = sphi 0, %s30
      %s24 = sphi 0, %s22
      %s25 = sphi 0, %s23
      %s26 = sphi 0, %s24
      %s27 = sphi 0, %s25
      %s35 = sphi 0, %s35
      %s37 = sphi 0, %s35
      %s38 = sphi 0, %s37
      %s52 = sphi 0, %s38
      %s60 = sphi 0, %s62
      %s63 = sphi 0, %s60
      %s64 = sphi 0, %s63
      %s80 = sphi 0, %s64
      %s88 = sphi 0, %s90
      %s91 = sphi 0, %s88
      %s92 = sphi 0, %s91
      %s108 = sphi 0, %s92
    $region4: #{tpu_custom_call.1} parent=1 // loop_header_branch
      %18 = sbr.rel (%p16) target = $region8
    $region5: #{tpu_custom_call.1} parent=1 // loop_body
      %s20 = ssub.s32 %s15, 1
      %s21 = ssub.s32 %s15, 2
      %s28 = sadd.s32 1, %s23
      %p29 = scmp.ge.s32.totalorder %s28, 1
      %s30 = scalar_select %p29, 0, %s28
      %s31 = sadd.s32 1, %s22
      %s32 = scalar_select %p29, %s31, %s22
      %p33 = scmp.ge.s32.totalorder %s32, 2
      %s34 = scalar_select %p33, 0, %s32
      %s36 = sadd.s32 %s35, 1
      %p39 = scmp.eq.s32.totalorder %s15, 1
      %p40 = scmp.ne.s32.totalorder %s35, %s37
      %p41 = scmp.eq.s32.totalorder %s15, 0
      %p42 = por %p40, %p41
      %p43 = scmp.ne.s32.totalorder %s35, %s37
      %p44 = scmp.eq.s32.totalorder %s20, 1
      %p45 = por %p43, %p44
      %p46 = scmp.ne.s32.totalorder %s37, %s38
      %p47 = scmp.eq.s32.totalorder %s20, 0
      %p48 = por %p46, %p47
      %p49 = scmp.ne.s32.totalorder %s37, %s38
      %p50 = scmp.eq.s32.totalorder %s21, 1
      %p51 = por %p49, %p50
      %p53 = scmp.ne.s32.totalorder %s38, %s52
      %p54 = scmp.eq.s32.totalorder %s21, 0
      %p55 = por %p53, %p54
      %s56 = ssub.s32 %s22, %s34
      %s57 = ssub.s32 %s23, %s30
      %s58 = sor.u32 %s56, %s57
      %p59 = scmp.eq.s32.totalorder %s58, 0
      %s61 = sadd.s32 %s60, 1
      %s62 = scalar_select %p59, %s60, %s61
      %p65 = pneg %p59
      %p66 = scmp.eq.s32.totalorder %s15, 1
      %p67 = por %p65, %p66
      %p68 = scmp.ne.s32.totalorder %s60, %s63
      %p69 = scmp.eq.s32.totalorder %s15, 0
      %p70 = por %p68, %p69
      %p71 = scmp.ne.s32.totalorder %s60, %s63
      %p72 = scmp.eq.s32.totalorder %s20, 1
      %p73 = por %p71, %p72
      %p74 = scmp.ne.s32.totalorder %s63, %s64
      %p75 = scmp.eq.s32.totalorder %s20, 0
      %p76 = por %p74, %p75
      %p77 = scmp.ne.s32.totalorder %s63, %s64
      %p78 = scmp.eq.s32.totalorder %s21, 1
      %p79 = por %p77, %p78
      %p81 = scmp.ne.s32.totalorder %s64, %s80
      %p82 = scmp.eq.s32.totalorder %s21, 0
      %p83 = por %p81, %p82
      %s84 = ssub.s32 %s22, %s34
      %s85 = ssub.s32 %s23, %s30
      %s86 = sor.u32 %s84, %s85
      %p87 = scmp.eq.s32.totalorder %s86, 0
      %s89 = sadd.s32 %s88, 1
      %s90 = scalar_select %p87, %s88, %s89
      %p93 = pneg %p87
      %p94 = scmp.eq.s32.totalorder %s15, 1
      %p95 = por %p93, %p94
      %p96 = scmp.ne.s32.totalorder %s88, %s91
      %p97 = scmp.eq.s32.totalorder %s15, 0
      %p98 = por %p96, %p97
      %p99 = scmp.ne.s32.totalorder %s88, %s91
      %p100 = scmp.eq.s32.totalorder %s20, 1
      %p101 = por %p99, %p100
      %p102 = scmp.ne.s32.totalorder %s91, %s92
      %p103 = scmp.eq.s32.totalorder %s20, 0
      %p104 = por %p102, %p103
      %p105 = scmp.ne.s32.totalorder %s91, %s92
      %p106 = scmp.eq.s32.totalorder %s21, 1
      %p107 = por %p105, %p106
      %p109 = scmp.ne.s32.totalorder %s92, %s108
      %p110 = scmp.eq.s32.totalorder %s21, 0
      %p111 = por %p109, %p110
      %p112 = scmp.le.s32.totalorder 1, %s15
      %p113 = scmp.lt.s32.totalorder %s15, 3
      %p114 = pnand %p112, %p113
      %p115 = pneg %p114
      // Predicated region
      $region9: #{tpu_custom_call.1} parent=5 // pred_check
        _
      $region10: #{tpu_custom_call.1} parent=5 // pred_check_branch
        %117 = sbr.rel (%p114) target = $region12
      $region11: #{tpu_custom_call.1} parent=5 // pred_region
        %s118 = ssub.s32 %s15, 1
        // Predicated region
        $region13: #{tpu_custom_call.1} parent=11 // pred_check
          %p119 = pneg %p48
        $region14: #{tpu_custom_call.1} parent=11 // pred_check_branch
          %121 = sbr.rel (%p119) target = $region16
        $region15: #{tpu_custom_call.1} parent=11 // pred_region
          %s123 = ssub.s32 256, 256
          %124 = vsyncadd [#allocation3], %s123
          %s125 = sshll.u32 [#allocation2], 4
          %s126 = int_to_ptr.vmem [resolvable:$true] %s125
          %131 = dma.hbm_to_vmem [thread:$0]  %s0, 256, %s126, [#allocation3], 128, 128, 8
        $region16: #{tpu_custom_call.1} parent=11 // pred_fallthru
          _
      $region12: #{tpu_custom_call.1} parent=5 // pred_fallthru
        _
      %p132 = scmp.lt.s32.totalorder %s15, 2
      // Predicated region
      $region17: #{tpu_custom_call.1} parent=5 // pred_check
        %p133 = pneg %p132
      $region18: #{tpu_custom_call.1} parent=5 // pred_check_branch
        %135 = sbr.rel (%p133) target = $region20
      $region19: #{tpu_custom_call.1} parent=5 // pred_region
        // Predicated region
        $region21: #{tpu_custom_call.1} parent=19 // pred_check
          %p136 = pneg %p70
        $region22: #{tpu_custom_call.1} parent=19 // pred_check_branch
          %138 = sbr.rel (%p136) target = $region24
        $region23: #{tpu_custom_call.1} parent=19 // pred_region
          %s139 = sand.u32 %s60, 1
          %s140 = scalar_lea.sflag [#allocation6], %s139
          %s141 = sand.u32 %s60, 1
          %s142 = smul.addr %s141, 16
          %s143 = scalar_lea.vmem [#allocation5], %s142
          %s145 = ssub.s32 256, 256
          %146 = vsyncadd %s140, %s145
          %s147 = smul.addr %s22, 2
          %s148 = sadd.s32 %s23, %s147
          %s149 = smul.addr %s148, 128
          %s150 = scalar_lea.hbm %s1, %s149
          %s151 = sshll.u32 %s143, 4
          %s152 = int_to_ptr.vmem [resolvable:$true] %s151
          %157 = dma.hbm_to_vmem [thread:$0]  %s150, 256, %s152, %s140, 128, 128, 8
        $region24: #{tpu_custom_call.1} parent=19 // pred_fallthru
          _
      $region20: #{tpu_custom_call.1} parent=5 // pred_fallthru
        _
      %p158 = scmp.le.s32.totalorder 1, %s15
      %p159 = scmp.lt.s32.totalorder %s15, 3
      %p160 = pnand %p158, %p159
      %p161 = pneg %p160
      // Predicated region
      $region25: #{tpu_custom_call.1} parent=5 // pred_check
        _
      $region26: #{tpu_custom_call.1} parent=5 // pred_check_branch
        %163 = sbr.rel (%p160) target = $region28
      $region27: #{tpu_custom_call.1} parent=5 // pred_region
        %s164 = ssub.s32 %s15, 1
        // Predicated region
        $region29: #{tpu_custom_call.1} parent=27 // pred_check
          %p165 = pneg %p48
        $region30: #{tpu_custom_call.1} parent=27 // pred_check_branch
          %167 = sbr.rel (%p165) target = $region32
        $region31: #{tpu_custom_call.1} parent=27 // pred_region
          %168 = dma.done [#allocation3], 256
        $region32: #{tpu_custom_call.1} parent=27 // pred_fallthru
          _
        %s169 = sand.u32 %s63, 1
        %s170 = scalar_lea.sflag [#allocation6], %s169
        %s171 = sand.u32 %s63, 1
        %s172 = smul.addr %s171, 16
        %s173 = scalar_lea.vmem [#allocation5], %s172
        // Predicated region
        $region33: #{tpu_custom_call.1} parent=27 // pred_check
          %p174 = pneg %p76
        $region34: #{tpu_custom_call.1} parent=27 // pred_check_branch
          %176 = sbr.rel (%p174) target = $region36
        $region35: #{tpu_custom_call.1} parent=27 // pred_region
          %177 = dma.done %s170, 256
        $region36: #{tpu_custom_call.1} parent=27 // pred_fallthru
          _
        %p178 = pneg %p48
        %p179 = pneg %p45
        %s180 = sand.u32 %s63, 1
        %s181 = scalar_lea.sflag [#allocation6], %s180
        %s182 = sand.u32 %s63, 1
        %s183 = smul.addr %s182, 16
        %s184 = scalar_lea.vmem [#allocation5], %s183
        %p185 = pneg %p76
        %p186 = pneg %p73
        %p187 = pneg %p104
        %p188 = pneg %p101
        %s189 = sand.u32 %s91, 1
        %s190 = scalar_lea.sflag [#allocation4], %s189
        %s191 = sand.u32 %s91, 1
        %s192 = smul.addr %s191, 16
        %s193 = scalar_lea.vmem [#allocation7], %s192
        %v194 = vld [vmem:[#allocation2] sm:$0xff]
        %v195 = vld [vmem:[#allocation2 + $0x8] sm:$0xff]
        %v196 = vld [vmem:[%s173] sm:$0xff]
        %v197 = vld [vmem:[%s173 + $0x8] sm:$0xff]
        %vm198 = vcmask 130048
        %v200 = vsel %vm198, %v194, 0
        %v203 = vsel %vm198, %v195, 0
        %205 = vmatprep.subr.mxu0 0.0
        %206 = vmatpush1.msra.mxu0 %v196
        %207 = vmatprep.subr.mxu0 0.0
        %208 = vmatpush1.msra.mxu0 %v197
        %209 = vmatprep.subr.mxu0 0.0
        %210 = vmatpush1.msra.mxu0 0.0
        %211 = vmatprep.subr.mxu0 0.0
        %212 = vmatpush1.msra.mxu0 0.0
        %213 = vmatprep.subr.mxu0 0.0
        %214 = vmatpush1.msra.mxu0 0.0
        %215 = vmatprep.subr.mxu0 0.0
        %216 = vmatpush1.msra.mxu0 0.0
        %217 = vmatprep.subr.mxu0 0.0
        %218 = vmatpush1.msra.mxu0 0.0
        %219 = vmatprep.subr.mxu0 0.0
        %220 = vmatpush1.msra.mxu0 0.0
        %221 = vmatprep.subr.mxu0 0.0
        %222 = vmatpush1.msra.mxu0 0.0
        %223 = vmatprep.subr.mxu0 0.0
        %224 = vmatpush1.msra.mxu0 0.0
        %225 = vmatprep.subr.mxu0 0.0
        %226 = vmatpush1.msra.mxu0 0.0
        %227 = vmatprep.subr.mxu0 0.0
        %228 = vmatpush1.msra.mxu0 0.0
        %229 = vmatprep.subr.mxu0 0.0
        %230 = vmatpush1.msra.mxu0 0.0
        %231 = vmatprep.subr.mxu0 0.0
        %232 = vmatpush1.msra.mxu0 0.0
        %233 = vmatprep.subr.mxu0 0.0
        %234 = vmatpush1.msra.mxu0 0.0
        %235 = vmatprep.subr.mxu0 0.0
        %236 = vmatpush1.msra.mxu0 0.0
        %237 = vmatprep.subr.mxu0 0.0
        %238 = vmatpush1.msra.mxu0 0.0
        %239 = vmatprep.subr.mxu0 0.0
        %240 = vmatpush1.msra.mxu0 0.0
        %241 = vmatprep.subr.mxu0 0.0
        %242 = vmatpush1.msra.mxu0 0.0
        %243 = vmatprep.subr.mxu0 0.0
        %244 = vmatpush1.msra.mxu0 0.0
        %245 = vmatprep.subr.mxu0 0.0
        %246 = vmatpush1.msra.mxu0 0.0
        %247 = vmatprep.subr.mxu0 0.0
        %248 = vmatpush1.msra.mxu0 0.0
        %249 = vmatprep.subr.mxu0 0.0
        %250 = vmatpush1.msra.mxu0 0.0
        %251 = vmatprep.subr.mxu0 0.0
        %252 = vmatpush1.msra.mxu0 0.0
        %253 = vmatprep.subr.mxu0 0.0
        %254 = vmatpush1.msra.mxu0 0.0
        %255 = vmatprep.subr.mxu0 0.0
        %256 = vmatpush1.msra.mxu0 0.0
        %257 = vmatprep.subr.mxu0 0.0
        %258 = vmatpush1.msra.mxu0 0.0
        %259 = vmatprep.subr.mxu0 0.0
        %260 = vmatpush1.msra.mxu0 0.0
        %261 = vmatprep.subr.mxu0 0.0
        %262 = vmatpush1.msra.mxu0 0.0
        %263 = vmatprep.subr.mxu0 0.0
        %264 = vmatpush1.msra.mxu0 0.0
        %265 = vmatprep.subr.mxu0 0.0
        %266 = vmatpush1.msra.mxu0 0.0
        %267 = vmatprep.subr.mxu0 0.0
        %268 = vmatpush1.msra.mxu0 0.0
        %269 = vmatprep.mubr.f32.mxu0 0.0
        %270 = vmatmul.mubr.f32.gmra.mrb[0].mxu0 %v200
        %v271 = vpop.f32.mrb[0].mxu0
        %v272 = vadd.f32 0.0, %v271
        %v273 = vpop.f32.mrb[0].mxu0
        %274 = vmatprep.mubr.f32.mxu0 0.0
        %275 = vmatmul.mubr.f32.gmra.mrb[0].mxu0 %v203
        %v276 = vpop.f32.mrb[0].mxu0
        %v277 = vadd.f32 0.0, %v276
        %v278 = vpop.f32.mrb[0].mxu0
        %279 = vdwg.mxu0
        %280 = vst.msk [vmem:[%s193] sm:$0xff] %vm198, %v272
        %281 = vst.msk [vmem:[%s193 + $0x8] sm:$0xff] %vm198, %v277
        %s282 = sand.u32 %s91, 1
        %s283 = scalar_lea.sflag [#allocation4], %s282
        %s284 = sand.u32 %s91, 1
        %s285 = smul.addr %s284, 16
        %s286 = scalar_lea.vmem [#allocation7], %s285
        // Predicated region
        $region37: #{tpu_custom_call.1} parent=27 // pred_check
          %p287 = pneg %p101
        $region38: #{tpu_custom_call.1} parent=27 // pred_check_branch
          %289 = sbr.rel (%p287) target = $region40
        $region39: #{tpu_custom_call.1} parent=27 // pred_region
          %s291 = ssub.s32 256, 256
          %292 = vsyncadd %s283, %s291
          %s293 = smul.addr %s24, 2
          %s294 = sadd.s32 %s25, %s293
          %s295 = smul.addr %s294, 128
          %s296 = scalar_lea.hbm %s2, %s295
          %s297 = sshll.u32 %s286, 4
          %s298 = int_to_ptr.vmem [resolvable:$true] %s297
          %303 = dma.vmem_to_hbm [thread:$0]  %s298, 256, %s296, %s283, 128, 128, 8
        $region40: #{tpu_custom_call.1} parent=27 // pred_fallthru
          _
      $region28: #{tpu_custom_call.1} parent=5 // pred_fallthru
        _
      %p304 = scmp.le.s32.totalorder 2, %s15
      // Predicated region
      $region41: #{tpu_custom_call.1} parent=5 // pred_check
        %p305 = pneg %p304
      $region42: #{tpu_custom_call.1} parent=5 // pred_check_branch
        %307 = sbr.rel (%p305) target = $region44
      $region43: #{tpu_custom_call.1} parent=5 // pred_region
        %s308 = ssub.s32 %s15, 2
        // Predicated region
        $region45: #{tpu_custom_call.1} parent=43 // pred_check
          %p309 = pneg %p107
        $region46: #{tpu_custom_call.1} parent=43 // pred_check_branch
          %311 = sbr.rel (%p309) target = $region48
        $region47: #{tpu_custom_call.1} parent=43 // pred_region
          %s312 = sand.u32 %s92, 1
          %s313 = scalar_lea.sflag [#allocation4], %s312
          %s314 = sand.u32 %s92, 1
          %s315 = smul.addr %s314, 16
          %s316 = scalar_lea.vmem [#allocation7], %s315
          %317 = dma.done %s313, 256
        $region48: #{tpu_custom_call.1} parent=43 // pred_fallthru
          _
      $region44: #{tpu_custom_call.1} parent=5 // pred_fallthru
        _
    $region6: #{tpu_custom_call.1} parent=1 // loop_footer
      %s19 = sadd.s32 1, %s15
    $region7: #{tpu_custom_call.1} parent=1 // loop_footer_branch
      %14 = sbr.rel target = $region3
    $region8: #{tpu_custom_call.1} parent=1 // loop_exit
      _
    %318 = vsyncpa [#allocation3], 1
    %s319 = scalar_lea.sflag [#allocation3], 1
    %320 = vsyncpa %s319, 1
    %321 = vsyncpa [#allocation6], 1
    %s322 = scalar_lea.sflag [#allocation6], 1
    %323 = vsyncpa %s322, 1
    %324 = vsyncpa [#allocation4], 1
    %s325 = scalar_lea.sflag [#allocation4], 1
    %326 = vsyncpa %s325, 1

</llo_original>
